<compile_context>
chip_gen: v7x
topology: tpu7x:2x2x1
jax: 0.10.0
libtpu: 0.0.40
codegen_flags: <defaults>
</compile_context>

<pallas_src>
import functools

import jax
import jax.numpy as jnp
import numpy as np
from jax.experimental import pallas as pl
from jax.experimental.pallas import tpu as pltpu


def _freq_bands(max_freq_log2, n_freqs, log_sampling=True):
    # Matches torch.linspace semantics (endpoint inclusive). The PyTorch
    # module converts these to Python floats (is_numpy=True path).
    if log_sampling:
        bands = 2.0 ** np.linspace(0.0, max_freq_log2, n_freqs, dtype=np.float64)
    else:
        bands = np.linspace(2.0 ** 0.0, 2.0 ** max_freq_log2, n_freqs,
                            dtype=np.float64)
    return tuple(float(b) for b in bands)


def _round_up(x, m):
    return ((x + m - 1) // m) * m


def _freq_encoder_kernel(x_ref, phase_ref, o_ref, *, freq_bands,
                         include_input, input_dim):
    # x_ref: (tile_rows, input_dim)   phase_ref: (1, out_dim)
    # o_ref: (tile_rows, out_dim)
    x = x_ref[...]
    xf = x.astype(jnp.float32)  # no-op for f32 inputs

    # Build the dense scaled tile in the final column order:
    #   [x, x*f0 (sin), x*f0 (cos), x*f1 (sin), x*f1 (cos), ...]
    pieces = []
    if include_input:
        pieces.append(xf)
    for f in freq_bands:
        xs = xf * jnp.float32(f)
        pieces.append(xs)   # sin columns
        pieces.append(xs)   # cos columns (phase-shifted below)
    scaled = pieces[0] if len(pieces) == 1 else jnp.concatenate(pieces, axis=-1)

    # One EUP pass over the dense tile: sin for sin-columns, sin(.+pi/2)=cos
    # for cos-columns.
    enc = jnp.sin(scaled + phase_ref[...])

    if include_input:
        # Identity columns: keep the (already scaled-by-1) input values.
        out_dim = scaled.shape[-1]
        col = jax.lax.broadcasted_iota(jnp.int32, (1, out_dim), 1)
        enc = jnp.where(col < input_dim, scaled, enc)

    # Single cast + single full-width store.
    o_ref[...] = enc.astype(o_ref.dtype)


def freq_encode(x, *, max_freq_log2, n_freqs, log_sampling=True,
                include_input=True, tile_rows=None):
    """Pallas FreqEncoder forward.

    x: (..., input_dim) float array.
    returns: (..., output_dim) with
             output_dim = input_dim * (include_input + 2 * n_freqs),
    columns ordered [x, sin(x*f0), cos(x*f0), sin(x*f1), cos(x*f1), ...]
    exactly as the PyTorch module's forward concatenation.
    """
    orig_shape = x.shape
    input_dim = orig_shape[-1]
    freq_bands = _freq_bands(max_freq_log2, n_freqs, log_sampling)
    n_pieces = (1 if include_input else 0) + 2 * len(freq_bands)
    out_dim = input_dim * n_pieces

    rows = int(np.prod(orig_shape[:-1])) if len(orig_shape) > 1 else 1
    if rows == 0 or out_dim == 0:
        return jnp.zeros((*orig_shape[:-1], out_dim), x.dtype)
    x2 = x.reshape(rows, input_dim)

    # Per-column phase row: 0 for identity/sin columns, pi/2 for cos columns.
    phase = np.zeros((1, out_dim), np.float32)
    col = input_dim if include_input else 0
    for _ in freq_bands:
        phase[0, col + input_dim: col + 2 * input_dim] = np.pi / 2.0
        col += 2 * input_dim
    phase = jnp.asarray(phase)

    # Tile selection: large tiles to amortize per-grid-step overhead; align to
    # 16 sublanes (covers f32 and bf16 packing); don't allocate oversized
    # tiles for tiny inputs; keep >=2 grid blocks when there's enough work so
    # both v7x TensorCores get a share under dimension_semantics=("parallel",).
    if tile_rows is None:
        tile_rows = 4096
    tile_rows = max(16, _round_up(tile_rows, 16))
    tile_rows = min(tile_rows, _round_up(rows, 16))
    if rows > 16 and pl.cdiv(rows, tile_rows) < 2:
        tile_rows = max(16, _round_up(pl.cdiv(rows, 2), 16))

    grid = (pl.cdiv(rows, tile_rows),)  # partial last block masked by Pallas

    kernel = functools.partial(
        _freq_encoder_kernel,
        freq_bands=freq_bands,
        include_input=include_input,
        input_dim=input_dim,
    )

    out = pl.pallas_call(
        kernel,
        out_shape=jax.ShapeDtypeStruct((rows, out_dim), x.dtype),
        grid_spec=pltpu.PrefetchScalarGridSpec(
            num_scalar_prefetch=0,
            grid=grid,
            in_specs=[
                pl.BlockSpec((tile_rows, input_dim), lambda i: (i, 0)),
                pl.BlockSpec((1, out_dim), lambda i: (0, 0)),
            ],
            out_specs=pl.BlockSpec((tile_rows, out_dim), lambda i: (i, 0)),
        ),
        compiler_params=pltpu.CompilerParams(
            dimension_semantics=("parallel",),
            # Raise v5e's 16 MiB scoped default so 4096-row tiles (plus the
            # dense in-kernel intermediates) fit everywhere; 32 MiB is within
            # every generation's physical VMEM.
            vmem_limit_bytes=32 * 1024 * 1024,
        ),
    )(x2, phase)

    return out.reshape(*orig_shape[:-1], out_dim)


def _reference(x, freq_bands, include_input=True):
    pieces = []
    if include_input:
        pieces.append(x)
    for f in freq_bands:
        pieces.append(jnp.sin(x * f))
        pieces.append(jnp.cos(x * f))
    return jnp.concatenate(pieces, axis=-1)


if __name__ == "__main__":
    # Module config consistent with typical NeRF usage at small size:
    input_dim = 4
    max_freq_log2 = 3
    n_freqs = 4
    expected_dim = input_dim * (1 + 2 * n_freqs)
    bands = _freq_bands(max_freq_log2, n_freqs, True)

    key = jax.random.PRNGKey(0)
    k0, k1, k2 = jax.random.split(key, 3)

    # Test 1: batch=2, seq=8, input_dim=4 (rows divide the tile exactly).
    x = jax.random.normal(k0, (2, 8, input_dim), dtype=jnp.float32)
    out = freq_encode(x, max_freq_log2=max_freq_log2, n_freqs=n_freqs,
                      log_sampling=True, include_input=True)
    out = jax.block_until_ready(out)
    assert out.shape == (2, 8, expected_dim), out.shape
    np.testing.assert_allclose(np.asarray(out),
                               np.asarray(_reference(x, bands)),
                               rtol=1e-5, atol=1e-5)

    # Test 2: non-divisible row count (3*7=21 rows) exercises the masked
    # partial final block and the >=2-block megacore split.
    x2 = jax.random.normal(k1, (3, 7, input_dim), dtype=jnp.float32)
    out2 = freq_encode(x2, max_freq_log2=max_freq_log2, n_freqs=n_freqs,
                       log_sampling=True, include_input=True)
    out2 = jax.block_until_ready(out2)
    assert out2.shape == (3, 7, expected_dim), out2.shape
    np.testing.assert_allclose(np.asarray(out2),
                               np.asarray(_reference(x2, bands)),
                               rtol=1e-5, atol=1e-5)

    # Test 3: a slightly larger input (2*256=512 rows) exercising a 2-block
    # grid with exact division.
    x3 = jax.random.normal(k2, (2, 256, input_dim), dtype=jnp.float32)
    out3 = freq_encode(x3, max_freq_log2=max_freq_log2, n_freqs=n_freqs,
                       log_sampling=True, include_input=True)
    out3 = jax.block_until_ready(out3)
    assert out3.shape == (2, 256, expected_dim), out3.shape
    np.testing.assert_allclose(np.asarray(out3),
                               np.asarray(_reference(x3, bands)),
                               rtol=1e-5, atol=1e-5)

    print("KERNEL_OK")
</pallas_src>

<mosaic_0001>
module attributes {stable_mosaic.version = 11 : i64} {
  func.func @_freq_encoder_kernel(%arg0: i32, %arg1: memref<16x4xf32, #tpu.memory_space<vmem>>, %arg2: memref<1x36xf32, #tpu.memory_space<vmem>>, %arg3: memref<16x36xf32, #tpu.memory_space<vmem>>) attributes {dimension_semantics = [#tpu.dimension_semantics<parallel>], iteration_bounds = array<i64: 1>, scalar_prefetch = 0 : i64, scratch_operands = 0 : i64, tpu.core_type = #tpu.core_type<tc>, window_params = [{transform_indices = @transform_0, window_bounds = array<i64: 16, 4>}, {pipeline_mode = #tpu.pipeline_mode<synchronous>, transform_indices = @transform_1, window_bounds = array<i64: 1, 36>}, {transform_indices = @transform_2, window_bounds = array<i64: 16, 36>}]} {
    %c0 = arith.constant 0 : index
    %c0_0 = arith.constant 0 : index
    %0 = vector.load %arg1[%c0, %c0_0] : memref<16x4xf32, #tpu.memory_space<vmem>>, vector<16x4xf32>
    %cst = arith.constant 1.000000e+00 : f32
    %1 = vector.broadcast %cst : f32 to vector<16x4xf32>
    %2 = arith.mulf %0, %1 : vector<16x4xf32>
    %cst_1 = arith.constant 2.000000e+00 : f32
    %3 = vector.broadcast %cst_1 : f32 to vector<16x4xf32>
    %4 = arith.mulf %0, %3 : vector<16x4xf32>
    %cst_2 = arith.constant 4.000000e+00 : f32
    %5 = vector.broadcast %cst_2 : f32 to vector<16x4xf32>
    %6 = arith.mulf %0, %5 : vector<16x4xf32>
    %cst_3 = arith.constant 8.000000e+00 : f32
    %7 = vector.broadcast %cst_3 : f32 to vector<16x4xf32>
    %8 = arith.mulf %0, %7 : vector<16x4xf32>
    %9 = tpu.concatenate %0, %2, %2, %4, %4, %6, %6, %8, %8 in 1 : vector<16x4xf32>, vector<16x4xf32>, vector<16x4xf32>, vector<16x4xf32>, vector<16x4xf32>, vector<16x4xf32>, vector<16x4xf32>, vector<16x4xf32>, vector<16x4xf32> -> vector<16x36xf32>
    %c0_4 = arith.constant 0 : index
    %c0_5 = arith.constant 0 : index
    %10 = vector.load %arg2[%c0_4, %c0_5] : memref<1x36xf32, #tpu.memory_space<vmem>>, vector<1x36xf32>
    %11 = vector.broadcast %10 : vector<1x36xf32> to vector<16x36xf32>
    %12 = arith.addf %9, %11 : vector<16x36xf32>
    %13 = math.sin %12 : vector<16x36xf32>
    %14 = tpu.iota {dimensions = array<i32: 1>} : vector<1x36xi32>
    %c4_i32 = arith.constant 4 : i32
    %15 = vector.broadcast %c4_i32 : i32 to vector<1x36xi32>
    %16 = arith.cmpi slt, %14, %15 : vector<1x36xi32>
    %17 = vector.shape_cast %16 : vector<1x36xi1> to vector<1x36xi1>
    %18 = vector.broadcast %17 : vector<1x36xi1> to vector<16x36xi1>
    %19 = arith.select %18, %9, %13 : vector<16x36xi1>, vector<16x36xf32>
    %c0_6 = arith.constant 0 : index
    %c0_7 = arith.constant 0 : index
    %20 = vector.load %arg3[%c0_6, %c0_7] : memref<16x36xf32, #tpu.memory_space<vmem>>, vector<16x36xf32>
    tpu.vector_store %arg3[%c0_6, %c0_7], %19 {strides = array<i32>} : memref<16x36xf32, #tpu.memory_space<vmem>>, vector<16x36xf32>,
    return
  }
  func.func @transform_0(%arg0: i32) -> (i32, i32) {
    %c0_i32 = arith.constant 0 : i32
    %c0_i32_0 = arith.constant 0 : i32
    return %arg0, %c0_i32 : i32, i32
  }
  func.func @transform_1(%arg0: i32) -> (i32, i32) {
    %c0_i32 = arith.constant 0 : i32
    %c0_i32_0 = arith.constant 0 : i32
    %c0_i32_1 = arith.constant 0 : i32
    return %c0_i32, %c0_i32_0 : i32, i32
  }
  func.func @transform_2(%arg0: i32) -> (i32, i32) {
    %c0_i32 = arith.constant 0 : i32
    %c0_i32_0 = arith.constant 0 : i32
    return %arg0, %c0_i32 : i32, i32
  }
}

</mosaic_0001>

<llo_original>
// kernel: tpu_custom_call.1
$region0: #{tpu_custom_call.1}
  #allocation0 [shape = 'u32[]', space=smem, size = 0x4, offset = 0x4, fixed_abs, tag = 'smem constant byte address 0x4 - core index']
  #allocation1 [shape = 'u32[144,128]{1,0:T(1,128)}', space=vmem, size = 0x12000, scoped, tag = 'internal scratch']
  %s0 = inlined_call_operand.vmem [shape: f32[16,4], index: 0, kind: input, shape index: {}]
  %s1 = inlined_call_operand.vmem [shape: f32[1,36], index: 1, kind: input, shape index: {}]
  %s2 = inlined_call_operand.hbm [shape: f32[16,36], index: 2, kind: output, shape index: {}]
  %s3 = sld [smem:[#allocation0]]
  $region18: #{tpu_custom_call.1} parent=0
    _
  %s5 = ssub.s32 1, %s3
  %s6 = scalar_select 0, %s5, %s3
  $region1: #{tpu_custom_call.1} parent=0
    #allocation2 [shape = 'u8[8192]{0}', space=vmem, size = 0x2000, scoped, tag = 'output window, operand 0, single buffered']
    #allocation3 [shape = 's32[1]{0}', space=sflag, size = 0x4, scoped, tag = 'scoped memory for tpu_custom_call.1']
    %7 = vsyncpa [#allocation3], 0
    // Predicated region
    $region2: #{tpu_custom_call.1} parent=1 // pred_check
      _
    $region3: #{tpu_custom_call.1} parent=1 // pred_check_branch
      %9 = sbr.rel (0) target = $region5
    $region4: #{tpu_custom_call.1} parent=1 // pred_region
      _
    $region5: #{tpu_custom_call.1} parent=1 // pred_fallthru
      _
    // Predicated region
    $region6: #{tpu_custom_call.1} parent=1 // pred_check
      _
    $region7: #{tpu_custom_call.1} parent=1 // pred_check_branch
      %11 = sbr.rel (0) target = $region9
    $region8: #{tpu_custom_call.1} parent=1 // pred_region
      _
    $region9: #{tpu_custom_call.1} parent=1 // pred_fallthru
      _
    %v12 = vld [vmem:[%s0] sm:$0xff]
    %v13 = vld [vmem:[%s0 + $0x8] sm:$0xff]
    %v14 = vmul.f32 %v12, 2.0
    %v15 = vmul.f32 %v13, 2.0
    %v16 = vmul.f32 %v12, 4.0
    %v17 = vmul.f32 %v13, 4.0
    %v18 = vmul.f32 %v12, 8.0
    %v19 = vmul.f32 %v13, 8.0
    %22 = vrot.lane.b32.xlu0 %v12, 4
    %v23 = vpop.permute.xlu0 %22
    %24 = vrot.lane.b32.xlu0 %v13, 4
    %v25 = vpop.permute.xlu0 %24
    %28 = vrot.lane.b32.xlu0 %v12, 8
    %v29 = vpop.permute.xlu0 %28
    %30 = vrot.lane.b32.xlu0 %v13, 8
    %v31 = vpop.permute.xlu0 %30
    %36 = vrot.lane.b32.xlu0 %v14, 12
    %v37 = vpop.permute.xlu0 %36
    %38 = vrot.lane.b32.xlu0 %v15, 12
    %v39 = vpop.permute.xlu0 %38
    %42 = vrot.lane.b32.xlu0 %v14, 16
    %v43 = vpop.permute.xlu0 %42
    %44 = vrot.lane.b32.xlu0 %v15, 16
    %v45 = vpop.permute.xlu0 %44
    %50 = vrot.lane.b32.xlu0 %v16, 20
    %v51 = vpop.permute.xlu0 %50
    %52 = vrot.lane.b32.xlu0 %v17, 20
    %v53 = vpop.permute.xlu0 %52
    %56 = vrot.lane.b32.xlu0 %v16, 24
    %v57 = vpop.permute.xlu0 %56
    %58 = vrot.lane.b32.xlu0 %v17, 24
    %v59 = vpop.permute.xlu0 %58
    %64 = vrot.lane.b32.xlu0 %v18, 28
    %v65 = vpop.permute.xlu0 %64
    %66 = vrot.lane.b32.xlu0 %v19, 28
    %v67 = vpop.permute.xlu0 %66
    %70 = vrot.lane.b32.xlu0 %v18, 32
    %v71 = vpop.permute.xlu0 %70
    %72 = vrot.lane.b32.xlu0 %v19, 32
    %v73 = vpop.permute.xlu0 %72
    %vm76 = vcmask 31744
    %v77 = vsel %vm76, %v12, %v23
    %v78 = vsel %vm76, %v13, %v25
    %vm79 = vcmask 64512
    %v80 = vsel %vm79, %v77, %v29
    %v81 = vsel %vm79, %v78, %v31
    %vm82 = vcmask 97280
    %v83 = vsel %vm82, %v80, %v37
    %v84 = vsel %vm82, %v81, %v39
    %vm85 = vcmask 130048
    %v86 = vsel %vm85, %v83, %v43
    %v87 = vsel %vm85, %v84, %v45
    %vm88 = vcmask 162816
    %v89 = vsel %vm88, %v86, %v51
    %v90 = vsel %vm88, %v87, %v53
    %vm91 = vcmask 195584
    %v92 = vsel %vm91, %v89, %v57
    %v93 = vsel %vm91, %v90, %v59
    %vm94 = vcmask 228352
    %v95 = vsel %vm94, %v92, %v65
    %v96 = vsel %vm94, %v93, %v67
    %vm97 = vcmask 261120
    %v98 = vsel %vm97, %v95, %v71
    %v99 = vsel %vm97, %v96, %v73
    %v100 = vld [vmem:[%s1] sm:$0x1]
    %v102 = vlaneseq
    %v103 = vshrl.u32 %v102, 7
    %v104 = vsub.s32 0, %v103
    %v105 = vrot.slane %v100, %v104
    %v107 = vadd.f32 %v98, %v105
    %v108 = vadd.f32 %v99, %v105
    %v109 = vand.u32 2147483647, %v107
    %vm110 = vcmp.le.f32.partialorder %v109, 0.7853982
    %vm111 = vcmp.lt.s32.totalorder %v107, 0
    %v112 = vand.u32 %v107, 2139095040
    %v113 = vshrl.u32 %v112, 23
    %v114 = vsub.s32 %v113, 127
    %v115 = vand.u32 2147483647, %v107
    %v116 = vand.u32 %v115, 8388607
    %v117 = vor.u32 %v116, 8388608
    %v118 = vsub.s32 0, %v117
    %v119 = vadd.s32 %v114, 1
    %vm120 = vcmp.gt.s32.totalorder %v119, 0
    %v121 = vsel %vm120, %v119, 0
    %v122 = vshrl.u32 %v121, 5
    %v123 = vand.u32 %v121, 31
    %v124 = vsub.s32 32, %v123
    %v125 = vshrl.u32 683565275, %v124
    %v126 = vshll.u32 683565275, %v123
    %v127 = vshrl.u32 2475754826, %v124
    %v128 = vor.u32 %v126, %v127
    %v129 = vshll.u32 2475754826, %v123
    %v130 = vshrl.u32 2131351028, %v124
    %v131 = vor.u32 %v129, %v130
    %v132 = vshll.u32 2131351028, %v123
    %v133 = vshrl.u32 2102212464, %v124
    %v134 = vor.u32 %v132, %v133
    %v135 = vshll.u32 2102212464, %v123
    %v136 = vshrl.u32 920167782, %v124
    %v137 = vor.u32 %v135, %v136
    %v138 = vshll.u32 920167782, %v123
    %v139 = vshrl.u32 1326507024, %v124
    %v140 = vor.u32 %v138, %v139
    %vm141 = vcmp.lt.s32.totalorder %v122, 1
    %vm142 = vcmp.lt.s32.totalorder %v122, 2
    %vm143 = vcmp.lt.s32.totalorder %v122, 3
    %vm144 = vcmp.lt.s32.totalorder %v122, 4
    %v145 = vsel %vm141, %v125, %v128
    %v146 = vsel %vm144, %v134, 2102212464
    %v147 = vsel %vm143, %v131, %v146
    %v148 = vsel %vm142, %v145, %v147
    %v149 = vsel %vm141, %v128, %v131
    %v150 = vsel %vm144, %v137, 920167782
    %v151 = vsel %vm143, %v134, %v150
    %v152 = vsel %vm142, %v149, %v151
    %v153 = vsel %vm141, %v131, %v134
    %v154 = vsel %vm144, %v140, 1326507024
    %v155 = vsel %vm143, %v137, %v154
    %v156 = vsel %vm142, %v153, %v155
    %v157 = vshll.u32 %v117, 8
    %v158 = vmul.u32.u64.compose %v157, %v156
    %v159 = vextract.low.u32 %v158
    %v160 = vextract.high.u32 %v158
    %v161 = vmul.u32.u64.compose %v157, %v152
    %v162 = vextract.low.u32 %v161
    %v163 = vextract.high.u32 %v161
    %v164 = vmul.u32 %v157, %v148
    %v165 = vadd.s32 %v160, %v162
    %vm166 = vc.u32 %v160, %v162
    %v167 = vadd.s32 %v163, 1
    %v168 = vsel %vm166, %v167, %v163
    %v169 = vadd.s32 %v164, %v168
    %v170 = vadd.s32 %v169, 536870912
    %v171 = vshrl.u32 %v170, 30
    %v172 = vshll.u32 %v171, 30
    %v173 = vsub.s32 %v169, %v172
    %vm174 = vcmp.lt.s32.totalorder %v173, 0
    %v175 = vsub.s32 0, %v173
    %v176 = vsel %vm174, %v175, %v173
    %v177 = vclz %v176
    %v178 = vsub.s32 %v177, 2
    %vm179 = vcmp.gt.s32.totalorder 0, %v178
    %v180 = vsel %vm179, 0, %v178
    %v181 = vsub.s32 32, %v180
    %v182 = vshll.u32 %v173, %v180
    %v183 = vshrl.u32 %v165, %v181
    %v184 = vor.u32 %v182, %v183
    %v185 = vsub.s32 4294967266, %v180
    %v186 = vadd.s32 %v185, 127
    %v187 = vshll.u32 %v186, 23
    %v188 = vor.u32 4788187, %v187
    %v189 = vand.u32 2147483647, %v188
    %v191 = vcvt.s32.f32 %v184
    %v192 = vmul.f32 %v191, %v189
    %v193 = vxor.u32 %v192, 2147483648
    %v194 = vsel %vm111, %v193, %v192
    %v195 = vsub.s32 4, %v171
    %v196 = vsel %vm111, %v195, %v171
    %v197 = vsel %vm110, %v107, %v194
    %v198 = vsel %vm110, 0, %v196
    %v199 = vcosq.f32.pop %v197
    %v200 = vsinq.f32.pop %v197
    %vm201 = vweird.f32 %v107
    %v202 = vadd.s32 %v198, 3
    %v203 = vand.u32 %v202, 3
    %vm204 = vcmp.lt.s32.totalorder %v203, 2
    %vm205 = vcmp.eq.s32.totalorder %v203, 0
    %v206 = vxor.u32 %v200, 2147483648
    %v207 = vsel %vm205, %v199, %v206
    %vm208 = vcmp.eq.s32.totalorder %v203, 2
    %v209 = vxor.u32 %v199, 2147483648
    %v210 = vsel %vm208, %v209, %v200
    %v211 = vsel %vm204, %v207, %v210
    %v212 = vsel %vm201, nan, %v211
    %v213 = vand.u32 2147483647, %v108
    %vm214 = vcmp.le.f32.partialorder %v213, 0.7853982
    %vm215 = vcmp.lt.s32.totalorder %v108, 0
    %v216 = vand.u32 %v108, 2139095040
    %v217 = vshrl.u32 %v216, 23
    %v218 = vsub.s32 %v217, 127
    %v219 = vand.u32 2147483647, %v108
    %v220 = vand.u32 %v219, 8388607
    %v221 = vor.u32 %v220, 8388608
    %v222 = vsub.s32 0, %v221
    %v223 = vadd.s32 %v218, 1
    %vm224 = vcmp.gt.s32.totalorder %v223, 0
    %v225 = vsel %vm224, %v223, 0
    %v226 = vshrl.u32 %v225, 5
    %v227 = vand.u32 %v225, 31
    %v228 = vsub.s32 32, %v227
    %v229 = vshrl.u32 683565275, %v228
    %v230 = vshll.u32 683565275, %v227
    %v231 = vshrl.u32 2475754826, %v228
    %v232 = vor.u32 %v230, %v231
    %v233 = vshll.u32 2475754826, %v227
    %v234 = vshrl.u32 2131351028, %v228
    %v235 = vor.u32 %v233, %v234
    %v236 = vshll.u32 2131351028, %v227
    %v237 = vshrl.u32 2102212464, %v228
    %v238 = vor.u32 %v236, %v237
    %v239 = vshll.u32 2102212464, %v227
    %v240 = vshrl.u32 920167782, %v228
    %v241 = vor.u32 %v239, %v240
    %v242 = vshll.u32 920167782, %v227
    %v243 = vshrl.u32 1326507024, %v228
    %v244 = vor.u32 %v242, %v243
    %vm245 = vcmp.lt.s32.totalorder %v226, 1
    %vm246 = vcmp.lt.s32.totalorder %v226, 2
    %vm247 = vcmp.lt.s32.totalorder %v226, 3
    %vm248 = vcmp.lt.s32.totalorder %v226, 4
    %v249 = vsel %vm245, %v229, %v232
    %v250 = vsel %vm248, %v238, 2102212464
    %v251 = vsel %vm247, %v235, %v250
    %v252 = vsel %vm246, %v249, %v251
    %v253 = vsel %vm245, %v232, %v235
    %v254 = vsel %vm248, %v241, 920167782
    %v255 = vsel %vm247, %v238, %v254
    %v256 = vsel %vm246, %v253, %v255
    %v257 = vsel %vm245, %v235, %v238
    %v258 = vsel %vm248, %v244, 1326507024
    %v259 = vsel %vm247, %v241, %v258
    %v260 = vsel %vm246, %v257, %v259
    %v261 = vshll.u32 %v221, 8
    %v262 = vmul.u32.u64.compose %v261, %v260
    %v263 = vextract.low.u32 %v262
    %v264 = vextract.high.u32 %v262
    %v265 = vmul.u32.u64.compose %v261, %v256
    %v266 = vextract.low.u32 %v265
    %v267 = vextract.high.u32 %v265
    %v268 = vmul.u32 %v261, %v252
    %v269 = vadd.s32 %v264, %v266
    %vm270 = vc.u32 %v264, %v266
    %v271 = vadd.s32 %v267, 1
    %v272 = vsel %vm270, %v271, %v267
    %v273 = vadd.s32 %v268, %v272
    %v274 = vadd.s32 %v273, 536870912
    %v275 = vshrl.u32 %v274, 30
    %v276 = vshll.u32 %v275, 30
    %v277 = vsub.s32 %v273, %v276
    %vm278 = vcmp.lt.s32.totalorder %v277, 0
    %v279 = vsub.s32 0, %v277
    %v280 = vsel %vm278, %v279, %v277
    %v281 = vclz %v280
    %v282 = vsub.s32 %v281, 2
    %vm283 = vcmp.gt.s32.totalorder 0, %v282
    %v284 = vsel %vm283, 0, %v282
    %v285 = vsub.s32 32, %v284
    %v286 = vshll.u32 %v277, %v284
    %v287 = vshrl.u32 %v269, %v285
    %v288 = vor.u32 %v286, %v287
    %v289 = vsub.s32 4294967266, %v284
    %v290 = vadd.s32 %v289, 127
    %v291 = vshll.u32 %v290, 23
    %v292 = vor.u32 4788187, %v291
    %v293 = vand.u32 2147483647, %v292
    %v295 = vcvt.s32.f32 %v288
    %v296 = vmul.f32 %v295, %v293
    %v297 = vxor.u32 %v296, 2147483648
    %v298 = vsel %vm215, %v297, %v296
    %v299 = vsub.s32 4, %v275
    %v300 = vsel %vm215, %v299, %v275
    %v301 = vsel %vm214, %v108, %v298
    %v302 = vsel %vm214, 0, %v300
    %v303 = vcosq.f32.pop %v301
    %v304 = vsinq.f32.pop %v301
    %vm305 = vweird.f32 %v108
    %v306 = vadd.s32 %v302, 3
    %v307 = vand.u32 %v306, 3
    %vm308 = vcmp.lt.s32.totalorder %v307, 2
    %vm309 = vcmp.eq.s32.totalorder %v307, 0
    %v310 = vxor.u32 %v304, 2147483648
    %v311 = vsel %vm309, %v303, %v310
    %vm312 = vcmp.eq.s32.totalorder %v307, 2
    %v313 = vxor.u32 %v303, 2147483648
    %v314 = vsel %vm312, %v313, %v304
    %v315 = vsel %vm308, %v311, %v314
    %v316 = vsel %vm305, nan, %v315
    %v317 = vlaneseq
    %v318 = vand.u32 %v317, 127
    %vm319 = vcmp.lt.s32.totalorder %v318, 4
    %v320 = vsel %vm319, 1, 0
    %vm321 = vcmp.eq.s32.totalorder %v320, 1
    %v322 = vsel %vm321, %v98, %v212
    %v323 = vsel %vm321, %v99, %v316
    %vm324 = vcmask 293888
    %325 = vst.msk [vmem:[#allocation2] sm:$0xff] %vm324, %v322
    %326 = vst.msk [vmem:[#allocation2 + $0x8] sm:$0xff] %vm324, %v323
    // Predicated region
    $region10: #{tpu_custom_call.1} parent=1 // pred_check
      _
    $region11: #{tpu_custom_call.1} parent=1 // pred_check_branch
      %328 = sbr.rel (0) target = $region13
    $region12: #{tpu_custom_call.1} parent=1 // pred_region
      %s330 = ssub.s32 256, 256
      %331 = vsyncadd [#allocation3], %s330
      %s332 = sshll.u32 [#allocation2], 4
      %s333 = int_to_ptr.vmem [resolvable:$true] %s332
      %338 = dma.vmem_to_hbm [thread:$0]  %s333, 256, %s2, [#allocation3], 128, 128, 8
    $region13: #{tpu_custom_call.1} parent=1 // pred_fallthru
      _
    // Predicated region
    $region14: #{tpu_custom_call.1} parent=1 // pred_check
      _
    $region15: #{tpu_custom_call.1} parent=1 // pred_check_branch
      %340 = sbr.rel (0) target = $region17
    $region16: #{tpu_custom_call.1} parent=1 // pred_region
      %341 = dma.done [#allocation3], 256
    $region17: #{tpu_custom_call.1} parent=1 // pred_fallthru
      _
    %342 = vsyncpa [#allocation3], 1

</llo_original>
